<compile_context>
chip_gen: v6e
topology: v6e:2x2x1
jax: 0.10.0
libtpu: 0.0.40
codegen_flags: <defaults>
</compile_context>

<pallas_src>
import functools

import jax
import jax.numpy as jnp
from jax.experimental import pallas as pl
from jax.experimental.pallas import tpu as pltpu


def _conv_chain_kernel(x_ref,
                       w1_ref, b1_ref,
                       w2_ref, b2_ref,
                       w3_ref, b3_ref,
                       w4_ref, b4_ref,
                       o_ref,
                       *, compute_dtype):
    # x_ref: (1, C_in, t_hw) slab of the (N, C_in, H*W) activation tensor.
    h = x_ref[0]                                    # (C_in, t_hw)

    def layer(w_ref, b_ref, h):
        # W @ h with f32 accumulation; MXU operands in compute_dtype.
        z = jnp.dot(w_ref[...].astype(compute_dtype),
                    h.astype(compute_dtype),
                    preferred_element_type=jnp.float32)
        # Bias (C_out, 1) broadcasts over lanes; bias-add + ReLU in f32.
        return jnp.maximum(z + b_ref[...].astype(jnp.float32), 0.0)

    h = layer(w1_ref, b1_ref, h)                    # conv1 + relu (33 -> 33)
    h = layer(w2_ref, b2_ref, h)                    # conv2 + relu (33 -> 8)
    h = layer(w3_ref, b3_ref, h)                    # conv3 + relu (8  -> 16)
    h = layer(w4_ref, b4_ref, h)                    # conv4 + relu (16 -> 4)

    o_ref[0] = h.astype(o_ref.dtype)                # lane-dense store


def _choose_spatial_tile(N, HW, max_tile, min_parallel_steps=2):
    """Pick a lane-axis tile: as large as possible (amortize per-step cost),
    but keep >= min_parallel_steps total grid steps so v7x's 2 TensorCores
    both get work."""
    LANE = 128
    t = HW if HW <= max_tile else max_tile
    steps = N * ((HW + t - 1) // t)
    if steps < min_parallel_steps and HW > LANE:
        t = -(-HW // min_parallel_steps)            # ceil(HW / steps)
        t = ((t + LANE - 1) // LANE) * LANE         # lane-align
    return t


def conv_chain_pallas(x_nchw, params, *,
                      max_spatial_tile=32768,
                      io_dtype=None,
                      compute_dtype=None):
    """x_nchw: (N, 33, H, W). Returns (N, 4, H, W) in x_nchw.dtype.

    max_spatial_tile: spatial (lane) tile width (multiple of 128). 32768
      keeps total VMEM use ~20-25 MiB double-buffered; we raise the scoped
      VMEM limit explicitly since the v5e default is only 16 MiB.
    io_dtype: optional cast of activations+weights at the HBM boundary
      (e.g. jnp.bfloat16 on v5e/v6e/v7x for ~2x bandwidth); f32 accumulation.
    compute_dtype: dtype fed to the MXU (e.g. jnp.bfloat16 to avoid multi-pass
      f32 emulation). Default None keeps the weights' dtype (exact f32 path).
    """
    (w1, b1), (w2, b2), (w3, b3), (w4, b4) = params
    N, C_in, H, W = x_nchw.shape
    assert C_in == w1.shape[1]
    C_out = w4.shape[0]
    HW = H * W
    out_dtype = x_nchw.dtype

    # NCHW -> (N, C, H*W): pure reshape, no transpose, no extra HBM traffic.
    x = x_nchw.reshape(N, C_in, HW)
    if io_dtype is not None:
        x = x.astype(io_dtype)
        w1, w2, w3, w4 = (w.astype(io_dtype) for w in (w1, w2, w3, w4))
    if compute_dtype is None:
        compute_dtype = w1.dtype

    t_hw = _choose_spatial_tile(N, HW, max_spatial_tile)
    grid = (N, pl.cdiv(HW, t_hw))

    x_spec = pl.BlockSpec((1, C_in, t_hw), lambda n, j: (n, 0, j))
    o_spec = pl.BlockSpec((1, C_out, t_hw), lambda n, j: (n, 0, j))

    def full_spec(shape):
        # Small weight/bias arrays: constant block index -> VMEM-resident.
        return pl.BlockSpec(shape, lambda n, j: (0,) * len(shape))

    # Explicit scoped-VMEM budget (v5e default is 16 MiB; v6e/v7x 32 MiB).
    in_bytes = C_in * t_hw * jnp.dtype(x.dtype).itemsize
    out_bytes = C_out * t_hw * jnp.dtype(out_dtype).itemsize
    interm_bytes = (33 + 33 + 8 + 16) * t_hw * 4        # f32 intermediates
    need = 2 * (in_bytes + out_bytes) + interm_bytes + (2 << 20)
    vmem_limit = int(min(max(need, 32 << 20), 56 << 20))  # v7x physical = 64 MiB

    kernel = functools.partial(_conv_chain_kernel, compute_dtype=compute_dtype)

    out = pl.pallas_call(
        kernel,
        out_shape=jax.ShapeDtypeStruct((N, C_out, HW), out_dtype),
        grid_spec=pltpu.PrefetchScalarGridSpec(
            num_scalar_prefetch=0,
            grid=grid,
            in_specs=[
                x_spec,
                full_spec(w1.shape), full_spec(b1.shape),
                full_spec(w2.shape), full_spec(b2.shape),
                full_spec(w3.shape), full_spec(b3.shape),
                full_spec(w4.shape), full_spec(b4.shape),
            ],
            out_specs=o_spec,
        ),
        compiler_params=pltpu.CompilerParams(
            dimension_semantics=("parallel", "parallel"),
            vmem_limit_bytes=vmem_limit),
    )(x, w1, b1, w2, b2, w3, b3, w4, b4)

    return out.reshape(N, C_out, H, W)


def make_params(key):
    """Deterministic params. Conv2d weight (co, ci, 1, 1) stored as (co, ci)
    (native PyTorch orientation, so the kernel does W @ x); bias as (co, 1)."""
    dims = [(33, 33), (33, 8), (8, 16), (16, 4)]
    params = []
    for (ci, co) in dims:
        key, kw, kb = jax.random.split(key, 3)
        bound = 1.0 / (ci ** 0.5)   # PyTorch default uniform bound for 1x1 conv
        w = jax.random.uniform(kw, (co, ci), jnp.float32, -bound, bound)
        b = jax.random.uniform(kb, (co, 1), jnp.float32, -bound, bound)
        params.append((w, b))
    return params


def reference_jax(x_nchw, params):
    # Pure-JAX reference in the same (channels, spatial) layout.
    N, C, H, W = x_nchw.shape
    h = x_nchw.reshape(N, C, H * W)
    for (w, b) in params:
        h = jnp.maximum(jnp.einsum('oc,ncs->nos', w, h) + b[None, :, :], 0.0)
    return h.reshape(N, -1, H, W)


if __name__ == "__main__":
    key = jax.random.PRNGKey(0)
    kx, kp = jax.random.split(key)

    # Small shapes consistent with the module: N=2, C_in=33 (fixed), H=W=16.
    x = jax.random.normal(kx, (2, 33, 16, 16), dtype=jnp.float32)
    params = make_params(kp)
    ref = reference_jax(x, params)

    # Exact f32 path (matches the PyTorch module numerics).
    out = jax.block_until_ready(conv_chain_pallas(x, params))
    assert out.shape == (2, 4, 16, 16)
    assert jnp.allclose(out, ref, atol=1e-4, rtol=1e-4)

    # Fast path: bf16 MXU operands + bf16 HBM I/O, f32 accumulation.
    out_fast = jax.block_until_ready(
        conv_chain_pallas(x, params,
                          io_dtype=jnp.bfloat16,
                          compute_dtype=jnp.bfloat16))
    assert out_fast.shape == (2, 4, 16, 16)
    assert jnp.allclose(out_fast, ref, atol=5e-2, rtol=5e-2)

    print("KERNEL_OK")
</pallas_src>

<mosaic_0001>
module attributes {stable_mosaic.version = 11 : i64} {
  func.func @_conv_chain_kernel(%arg0: i32, %arg1: i32, %arg2: memref<1x33x256xf32, #tpu.memory_space<vmem>>, %arg3: memref<33x33xf32, #tpu.memory_space<vmem>>, %arg4: memref<33x1xf32, #tpu.memory_space<vmem>>, %arg5: memref<8x33xf32, #tpu.memory_space<vmem>>, %arg6: memref<8x1xf32, #tpu.memory_space<vmem>>, %arg7: memref<16x8xf32, #tpu.memory_space<vmem>>, %arg8: memref<16x1xf32, #tpu.memory_space<vmem>>, %arg9: memref<4x16xf32, #tpu.memory_space<vmem>>, %arg10: memref<4x1xf32, #tpu.memory_space<vmem>>, %arg11: memref<1x4x256xf32, #tpu.memory_space<vmem>>) attributes {dimension_semantics = [#tpu.dimension_semantics<parallel>, #tpu.dimension_semantics<parallel>], iteration_bounds = array<i64: 2, 1>, scalar_prefetch = 0 : i64, scratch_operands = 0 : i64, tpu.core_type = #tpu.core_type<tc>, window_params = [{transform_indices = @transform_0, window_bounds = array<i64: 1, 33, 256>}, {pipeline_mode = #tpu.pipeline_mode<synchronous>, transform_indices = @transform_1, window_bounds = array<i64: 33, 33>}, {pipeline_mode = #tpu.pipeline_mode<synchronous>, transform_indices = @transform_2, window_bounds = array<i64: 33, 1>}, {pipeline_mode = #tpu.pipeline_mode<synchronous>, transform_indices = @transform_3, window_bounds = array<i64: 8, 33>}, {pipeline_mode = #tpu.pipeline_mode<synchronous>, transform_indices = @transform_4, window_bounds = array<i64: 8, 1>}, {pipeline_mode = #tpu.pipeline_mode<synchronous>, transform_indices = @transform_5, window_bounds = array<i64: 16, 8>}, {pipeline_mode = #tpu.pipeline_mode<synchronous>, transform_indices = @transform_6, window_bounds = array<i64: 16, 1>}, {pipeline_mode = #tpu.pipeline_mode<synchronous>, transform_indices = @transform_7, window_bounds = array<i64: 4, 16>}, {pipeline_mode = #tpu.pipeline_mode<synchronous>, transform_indices = @transform_8, window_bounds = array<i64: 4, 1>}, {transform_indices = @transform_9, window_bounds = array<i64: 1, 4, 256>}]} {
    %c0 = arith.constant 0 : index
    %c0_0 = arith.constant 0 : index
    %c0_1 = arith.constant 0 : index
    %0 = vector.load %arg2[%c0, %c0_0, %c0_1] : memref<1x33x256xf32, #tpu.memory_space<vmem>>, vector<1x33x256xf32>
    %1 = vector.shape_cast %0 : vector<1x33x256xf32> to vector<33x256xf32>
    %c0_2 = arith.constant 0 : index
    %c0_3 = arith.constant 0 : index
    %2 = vector.load %arg3[%c0_2, %c0_3] : memref<33x33xf32, #tpu.memory_space<vmem>>, vector<33x33xf32>
    %cst = arith.constant dense<0.000000e+00> : vector<33x256xf32>
    %3 = tpu.matmul %2, %1, %cst {dimension_numbers = #tpu.dot_dimension_numbers<[1], [0], [0], [1], [0, 0, 1, 1], [], []>} : vector<33x33xf32>, vector<33x256xf32>, vector<33x256xf32> -> vector<33x256xf32>
    %c0_4 = arith.constant 0 : index
    %c0_5 = arith.constant 0 : index
    %4 = vector.load %arg4[%c0_4, %c0_5] : memref<33x1xf32, #tpu.memory_space<vmem>>, vector<33x1xf32>
    %5 = vector.broadcast %4 : vector<33x1xf32> to vector<33x256xf32>
    %6 = arith.addf %3, %5 : vector<33x256xf32>
    %cst_6 = arith.constant 0.000000e+00 : f32
    %7 = vector.broadcast %cst_6 : f32 to vector<33x256xf32>
    %8 = arith.maximumf %6, %7 : vector<33x256xf32>
    %c0_7 = arith.constant 0 : index
    %c0_8 = arith.constant 0 : index
    %9 = vector.load %arg5[%c0_7, %c0_8] : memref<8x33xf32, #tpu.memory_space<vmem>>, vector<8x33xf32>
    %cst_9 = arith.constant dense<0.000000e+00> : vector<8x256xf32>
    %10 = tpu.matmul %9, %8, %cst_9 {dimension_numbers = #tpu.dot_dimension_numbers<[1], [0], [0], [1], [0, 0, 1, 1], [], []>} : vector<8x33xf32>, vector<33x256xf32>, vector<8x256xf32> -> vector<8x256xf32>
    %c0_10 = arith.constant 0 : index
    %c0_11 = arith.constant 0 : index
    %11 = vector.load %arg6[%c0_10, %c0_11] : memref<8x1xf32, #tpu.memory_space<vmem>>, vector<8x1xf32>
    %12 = vector.broadcast %11 : vector<8x1xf32> to vector<8x256xf32>
    %13 = arith.addf %10, %12 : vector<8x256xf32>
    %cst_12 = arith.constant 0.000000e+00 : f32
    %14 = vector.broadcast %cst_12 : f32 to vector<8x256xf32>
    %15 = arith.maximumf %13, %14 : vector<8x256xf32>
    %c0_13 = arith.constant 0 : index
    %c0_14 = arith.constant 0 : index
    %16 = vector.load %arg7[%c0_13, %c0_14] : memref<16x8xf32, #tpu.memory_space<vmem>>, vector<16x8xf32>
    %cst_15 = arith.constant dense<0.000000e+00> : vector<16x256xf32>
    %17 = tpu.matmul %16, %15, %cst_15 {dimension_numbers = #tpu.dot_dimension_numbers<[1], [0], [0], [1], [0, 0, 1, 1], [], []>} : vector<16x8xf32>, vector<8x256xf32>, vector<16x256xf32> -> vector<16x256xf32>
    %c0_16 = arith.constant 0 : index
    %c0_17 = arith.constant 0 : index
    %18 = vector.load %arg8[%c0_16, %c0_17] : memref<16x1xf32, #tpu.memory_space<vmem>>, vector<16x1xf32>
    %19 = vector.broadcast %18 : vector<16x1xf32> to vector<16x256xf32>
    %20 = arith.addf %17, %19 : vector<16x256xf32>
    %cst_18 = arith.constant 0.000000e+00 : f32
    %21 = vector.broadcast %cst_18 : f32 to vector<16x256xf32>
    %22 = arith.maximumf %20, %21 : vector<16x256xf32>
    %c0_19 = arith.constant 0 : index
    %c0_20 = arith.constant 0 : index
    %23 = vector.load %arg9[%c0_19, %c0_20] : memref<4x16xf32, #tpu.memory_space<vmem>>, vector<4x16xf32>
    %cst_21 = arith.constant dense<0.000000e+00> : vector<4x256xf32>
    %24 = tpu.matmul %23, %22, %cst_21 {dimension_numbers = #tpu.dot_dimension_numbers<[1], [0], [0], [1], [0, 0, 1, 1], [], []>} : vector<4x16xf32>, vector<16x256xf32>, vector<4x256xf32> -> vector<4x256xf32>
    %c0_22 = arith.constant 0 : index
    %c0_23 = arith.constant 0 : index
    %25 = vector.load %arg10[%c0_22, %c0_23] : memref<4x1xf32, #tpu.memory_space<vmem>>, vector<4x1xf32>
    %26 = vector.broadcast %25 : vector<4x1xf32> to vector<4x256xf32>
    %27 = arith.addf %24, %26 : vector<4x256xf32>
    %cst_24 = arith.constant 0.000000e+00 : f32
    %28 = vector.broadcast %cst_24 : f32 to vector<4x256xf32>
    %29 = arith.maximumf %27, %28 : vector<4x256xf32>
    %c0_25 = arith.constant 0 : index
    %c0_26 = arith.constant 0 : index
    %c0_27 = arith.constant 0 : index
    %30 = vector.load %arg11[%c0_25, %c0_26, %c0_27] : memref<1x4x256xf32, #tpu.memory_space<vmem>>, vector<1x4x256xf32>
    %31 = vector.shape_cast %30 : vector<1x4x256xf32> to vector<4x256xf32>
    %32 = vector.shape_cast %29 : vector<4x256xf32> to vector<1x4x256xf32>
    tpu.vector_store %arg11[%c0_25, %c0_26, %c0_27], %32 {strides = array<i32>} : memref<1x4x256xf32, #tpu.memory_space<vmem>>, vector<1x4x256xf32>,
    return
  }
  func.func @transform_0(%arg0: i32, %arg1: i32) -> (i32, i32, i32) {
    %c0_i32 = arith.constant 0 : i32
    %c0_i32_0 = arith.constant 0 : i32
    return %arg0, %c0_i32, %arg1 : i32, i32, i32
  }
  func.func @transform_1(%arg0: i32, %arg1: i32) -> (i32, i32) {
    %c0_i32 = arith.constant 0 : i32
    %c0_i32_0 = arith.constant 0 : i32
    %c0_i32_1 = arith.constant 0 : i32
    return %c0_i32, %c0_i32_0 : i32, i32
  }
  func.func @transform_2(%arg0: i32, %arg1: i32) -> (i32, i32) {
    %c0_i32 = arith.constant 0 : i32
    %c0_i32_0 = arith.constant 0 : i32
    %c0_i32_1 = arith.constant 0 : i32
    return %c0_i32, %c0_i32_0 : i32, i32
  }
  func.func @transform_3(%arg0: i32, %arg1: i32) -> (i32, i32) {
    %c0_i32 = arith.constant 0 : i32
    %c0_i32_0 = arith.constant 0 : i32
    %c0_i32_1 = arith.constant 0 : i32
    return %c0_i32, %c0_i32_0 : i32, i32
  }
  func.func @transform_4(%arg0: i32, %arg1: i32) -> (i32, i32) {
    %c0_i32 = arith.constant 0 : i32
    %c0_i32_0 = arith.constant 0 : i32
    %c0_i32_1 = arith.constant 0 : i32
    return %c0_i32, %c0_i32_0 : i32, i32
  }
  func.func @transform_5(%arg0: i32, %arg1: i32) -> (i32, i32) {
    %c0_i32 = arith.constant 0 : i32
    %c0_i32_0 = arith.constant 0 : i32
    %c0_i32_1 = arith.constant 0 : i32
    return %c0_i32, %c0_i32_0 : i32, i32
  }
  func.func @transform_6(%arg0: i32, %arg1: i32) -> (i32, i32) {
    %c0_i32 = arith.constant 0 : i32
    %c0_i32_0 = arith.constant 0 : i32
    %c0_i32_1 = arith.constant 0 : i32
    return %c0_i32, %c0_i32_0 : i32, i32
  }
  func.func @transform_7(%arg0: i32, %arg1: i32) -> (i32, i32) {
    %c0_i32 = arith.constant 0 : i32
    %c0_i32_0 = arith.constant 0 : i32
    %c0_i32_1 = arith.constant 0 : i32
    return %c0_i32, %c0_i32_0 : i32, i32
  }
  func.func @transform_8(%arg0: i32, %arg1: i32) -> (i32, i32) {
    %c0_i32 = arith.constant 0 : i32
    %c0_i32_0 = arith.constant 0 : i32
    %c0_i32_1 = arith.constant 0 : i32
    return %c0_i32, %c0_i32_0 : i32, i32
  }
  func.func @transform_9(%arg0: i32, %arg1: i32) -> (i32, i32, i32) {
    %c0_i32 = arith.constant 0 : i32
    %c0_i32_0 = arith.constant 0 : i32
    return %arg0, %c0_i32, %arg1 : i32, i32, i32
  }
}

</mosaic_0001>

<llo_original>
// kernel: tpu_custom_call.1
$region0: #{tpu_custom_call.1}
  #allocation0 [shape = 'u32[]', space=smem, size = 0x4, offset = 0x4, fixed_abs, tag = 'smem constant byte address 0x4 - core index']
  #allocation1 [shape = 'u32[144,128]{1,0:T(1,128)}', space=vmem, size = 0x12000, scoped, tag = 'internal scratch']
  %s0 = inlined_call_operand.vmem [shape: f32[2,33,256], index: 0, kind: input, shape index: {}]
  %s1 = inlined_call_operand.vmem [shape: f32[33,33], index: 1, kind: input, shape index: {}]
  %s2 = inlined_call_operand.vmem [shape: f32[33,1], index: 2, kind: input, shape index: {}]
  %s3 = inlined_call_operand.vmem [shape: f32[8,33], index: 3, kind: input, shape index: {}]
  %s4 = inlined_call_operand.vmem [shape: f32[8,1], index: 4, kind: input, shape index: {}]
  %s5 = inlined_call_operand.vmem [shape: f32[16,8], index: 5, kind: input, shape index: {}]
  %s6 = inlined_call_operand.vmem [shape: f32[16,1], index: 6, kind: input, shape index: {}]
  %s7 = inlined_call_operand.vmem [shape: f32[4,16], index: 7, kind: input, shape index: {}]
  %s8 = inlined_call_operand.vmem [shape: f32[4,1], index: 8, kind: input, shape index: {}]
  %s9 = inlined_call_operand.hbm [shape: f32[2,4,256], index: 9, kind: output, shape index: {}]
  %s10 = sld [smem:[#allocation0]]
  $region69: #{tpu_custom_call.1} parent=0
    _
  %s12 = ssub.s32 1, %s10
  %s13 = scalar_select 0, %s12, %s10
  $region1: #{tpu_custom_call.1} parent=0
    #allocation2 [shape = 'u8[8192]{0}', space=vmem, size = 0x2000, scoped, tag = 'output window, operand 0']
    #allocation3 [shape = 's32[2]{0}', space=sflag, size = 0x8, scoped, tag = 'scoped memory for tpu_custom_call.1']
    %14 = vsyncpa [#allocation3], 0
    %s15 = scalar_lea.sflag [#allocation3], 1
    %16 = vsyncpa %s15, 0
    loop: start=0, step=1, limit=4
    $region2: #{tpu_custom_call.1} parent=1 // loop_pre_header
      _
    $region3: #{tpu_custom_call.1} parent=1 // loop_header
      %s18 = sphi 0, %s22
      %p19 = scmp.ge.s32.totalorder %s18, 4
      %s25 = sphi 0, %s37
      %s26 = sphi 0, %s33
      %s27 = sphi 0, %s25
      %s28 = sphi 0, %s26
      %s29 = sphi 0, %s27
      %s30 = sphi 0, %s28
      %s42 = sphi 0, %s44
      %s45 = sphi 0, %s42
      %s46 = sphi 0, %s45
      %s62 = sphi 0, %s46
      %s66 = sphi 0, %s66
      %s68 = sphi 0, %s66
      %s69 = sphi 0, %s68
      %s83 = sphi 0, %s69
      %s87 = sphi 0, %s87
      %s89 = sphi 0, %s87
      %s90 = sphi 0, %s89
      %s104 = sphi 0, %s90
      %s108 = sphi 0, %s108
      %s110 = sphi 0, %s108
      %s111 = sphi 0, %s110
      %s125 = sphi 0, %s111
      %s129 = sphi 0, %s129
      %s131 = sphi 0, %s129
      %s132 = sphi 0, %s131
      %s146 = sphi 0, %s132
      %s150 = sphi 0, %s150
      %s152 = sphi 0, %s150
      %s153 = sphi 0, %s152
      %s167 = sphi 0, %s153
      %s171 = sphi 0, %s171
      %s173 = sphi 0, %s171
      %s174 = sphi 0, %s173
      %s188 = sphi 0, %s174
      %s192 = sphi 0, %s192
      %s194 = sphi 0, %s192
      %s195 = sphi 0, %s194
      %s209 = sphi 0, %s195
      %s213 = sphi 0, %s213
      %s215 = sphi 0, %s213
      %s216 = sphi 0, %s215
      %s230 = sphi 0, %s216
      %s238 = sphi 0, %s240
      %s241 = sphi 0, %s238
      %s242 = sphi 0, %s241
      %s258 = sphi 0, %s242
    $region4: #{tpu_custom_call.1} parent=1 // loop_header_branch
      %21 = sbr.rel (%p19) target = $region8
    $region5: #{tpu_custom_call.1} parent=1 // loop_body
      %s23 = ssub.s32 %s18, 1
      %s24 = ssub.s32 %s18, 2
      %s31 = sadd.s32 1, %s26
      %p32 = scmp.ge.s32.totalorder %s31, 1
      %s33 = scalar_select %p32, 0, %s31
      %s34 = sadd.s32 1, %s25
      %s35 = scalar_select %p32, %s34, %s25
      %p36 = scmp.ge.s32.totalorder %s35, 2
      %s37 = scalar_select %p36, 0, %s35
      %s38 = ssub.s32 %s25, %s37
      %s39 = ssub.s32 %s26, %s33
      %s40 = sor.u32 %s38, %s39
      %p41 = scmp.eq.s32.totalorder %s40, 0
      %s43 = sadd.s32 %s42, 1
      %s44 = scalar_select %p41, %s42, %s43
      %p47 = pneg %p41
      %p48 = scmp.eq.s32.totalorder %s18, 1
      %p49 = por %p47, %p48
      %p50 = scmp.ne.s32.totalorder %s42, %s45
      %p51 = scmp.eq.s32.totalorder %s18, 0
      %p52 = por %p50, %p51
      %p53 = scmp.ne.s32.totalorder %s42, %s45
      %p54 = scmp.eq.s32.totalorder %s23, 1
      %p55 = por %p53, %p54
      %p56 = scmp.ne.s32.totalorder %s45, %s46
      %p57 = scmp.eq.s32.totalorder %s23, 0
      %p58 = por %p56, %p57
      %p59 = scmp.ne.s32.totalorder %s45, %s46
      %p60 = scmp.eq.s32.totalorder %s24, 1
      %p61 = por %p59, %p60
      %p63 = scmp.ne.s32.totalorder %s46, %s62
      %p64 = scmp.eq.s32.totalorder %s24, 0
      %p65 = por %p63, %p64
      %s67 = sadd.s32 %s66, 1
      %p70 = scmp.eq.s32.totalorder %s18, 1
      %p71 = scmp.ne.s32.totalorder %s66, %s68
      %p72 = scmp.eq.s32.totalorder %s18, 0
      %p73 = por %p71, %p72
      %p74 = scmp.ne.s32.totalorder %s66, %s68
      %p75 = scmp.eq.s32.totalorder %s23, 1
      %p76 = por %p74, %p75
      %p77 = scmp.ne.s32.totalorder %s68, %s69
      %p78 = scmp.eq.s32.totalorder %s23, 0
      %p79 = por %p77, %p78
      %p80 = scmp.ne.s32.totalorder %s68, %s69
      %p81 = scmp.eq.s32.totalorder %s24, 1
      %p82 = por %p80, %p81
      %p84 = scmp.ne.s32.totalorder %s69, %s83
      %p85 = scmp.eq.s32.totalorder %s24, 0
      %p86 = por %p84, %p85
      %s88 = sadd.s32 %s87, 1
      %p91 = scmp.eq.s32.totalorder %s18, 1
      %p92 = scmp.ne.s32.totalorder %s87, %s89
      %p93 = scmp.eq.s32.totalorder %s18, 0
      %p94 = por %p92, %p93
      %p95 = scmp.ne.s32.totalorder %s87, %s89
      %p96 = scmp.eq.s32.totalorder %s23, 1
      %p97 = por %p95, %p96
      %p98 = scmp.ne.s32.totalorder %s89, %s90
      %p99 = scmp.eq.s32.totalorder %s23, 0
      %p100 = por %p98, %p99
      %p101 = scmp.ne.s32.totalorder %s89, %s90
      %p102 = scmp.eq.s32.totalorder %s24, 1
      %p103 = por %p101, %p102
      %p105 = scmp.ne.s32.totalorder %s90, %s104
      %p106 = scmp.eq.s32.totalorder %s24, 0
      %p107 = por %p105, %p106
      %s109 = sadd.s32 %s108, 1
      %p112 = scmp.eq.s32.totalorder %s18, 1
      %p113 = scmp.ne.s32.totalorder %s108, %s110
      %p114 = scmp.eq.s32.totalorder %s18, 0
      %p115 = por %p113, %p114
      %p116 = scmp.ne.s32.totalorder %s108, %s110
      %p117 = scmp.eq.s32.totalorder %s23, 1
      %p118 = por %p116, %p117
      %p119 = scmp.ne.s32.totalorder %s110, %s111
      %p120 = scmp.eq.s32.totalorder %s23, 0
      %p121 = por %p119, %p120
      %p122 = scmp.ne.s32.totalorder %s110, %s111
      %p123 = scmp.eq.s32.totalorder %s24, 1
      %p124 = por %p122, %p123
      %p126 = scmp.ne.s32.totalorder %s111, %s125
      %p127 = scmp.eq.s32.totalorder %s24, 0
      %p128 = por %p126, %p127
      %s130 = sadd.s32 %s129, 1
      %p133 = scmp.eq.s32.totalorder %s18, 1
      %p134 = scmp.ne.s32.totalorder %s129, %s131
      %p135 = scmp.eq.s32.totalorder %s18, 0
      %p136 = por %p134, %p135
      %p137 = scmp.ne.s32.totalorder %s129, %s131
      %p138 = scmp.eq.s32.totalorder %s23, 1
      %p139 = por %p137, %p138
      %p140 = scmp.ne.s32.totalorder %s131, %s132
      %p141 = scmp.eq.s32.totalorder %s23, 0
      %p142 = por %p140, %p141
      %p143 = scmp.ne.s32.totalorder %s131, %s132
      %p144 = scmp.eq.s32.totalorder %s24, 1
      %p145 = por %p143, %p144
      %p147 = scmp.ne.s32.totalorder %s132, %s146
      %p148 = scmp.eq.s32.totalorder %s24, 0
      %p149 = por %p147, %p148
      %s151 = sadd.s32 %s150, 1
      %p154 = scmp.eq.s32.totalorder %s18, 1
      %p155 = scmp.ne.s32.totalorder %s150, %s152
      %p156 = scmp.eq.s32.totalorder %s18, 0
      %p157 = por %p155, %p156
      %p158 = scmp.ne.s32.totalorder %s150, %s152
      %p159 = scmp.eq.s32.totalorder %s23, 1
      %p160 = por %p158, %p159
      %p161 = scmp.ne.s32.totalorder %s152, %s153
      %p162 = scmp.eq.s32.totalorder %s23, 0
      %p163 = por %p161, %p162
      %p164 = scmp.ne.s32.totalorder %s152, %s153
      %p165 = scmp.eq.s32.totalorder %s24, 1
      %p166 = por %p164, %p165
      %p168 = scmp.ne.s32.totalorder %s153, %s167
      %p169 = scmp.eq.s32.totalorder %s24, 0
      %p170 = por %p168, %p169
      %s172 = sadd.s32 %s171, 1
      %p175 = scmp.eq.s32.totalorder %s18, 1
      %p176 = scmp.ne.s32.totalorder %s171, %s173
      %p177 = scmp.eq.s32.totalorder %s18, 0
      %p178 = por %p176, %p177
      %p179 = scmp.ne.s32.totalorder %s171, %s173
      %p180 = scmp.eq.s32.totalorder %s23, 1
      %p181 = por %p179, %p180
      %p182 = scmp.ne.s32.totalorder %s173, %s174
      %p183 = scmp.eq.s32.totalorder %s23, 0
      %p184 = por %p182, %p183
      %p185 = scmp.ne.s32.totalorder %s173, %s174
      %p186 = scmp.eq.s32.totalorder %s24, 1
      %p187 = por %p185, %p186
      %p189 = scmp.ne.s32.totalorder %s174, %s188
      %p190 = scmp.eq.s32.totalorder %s24, 0
      %p191 = por %p189, %p190
      %s193 = sadd.s32 %s192, 1
      %p196 = scmp.eq.s32.totalorder %s18, 1
      %p197 = scmp.ne.s32.totalorder %s192, %s194
      %p198 = scmp.eq.s32.totalorder %s18, 0
      %p199 = por %p197, %p198
      %p200 = scmp.ne.s32.totalorder %s192, %s194
      %p201 = scmp.eq.s32.totalorder %s23, 1
      %p202 = por %p200, %p201
      %p203 = scmp.ne.s32.totalorder %s194, %s195
      %p204 = scmp.eq.s32.totalorder %s23, 0
      %p205 = por %p203, %p204
      %p206 = scmp.ne.s32.totalorder %s194, %s195
      %p207 = scmp.eq.s32.totalorder %s24, 1
      %p208 = por %p206, %p207
      %p210 = scmp.ne.s32.totalorder %s195, %s209
      %p211 = scmp.eq.s32.totalorder %s24, 0
      %p212 = por %p210, %p211
      %s214 = sadd.s32 %s213, 1
      %p217 = scmp.eq.s32.totalorder %s18, 1
      %p218 = scmp.ne.s32.totalorder %s213, %s215
      %p219 = scmp.eq.s32.totalorder %s18, 0
      %p220 = por %p218, %p219
      %p221 = scmp.ne.s32.totalorder %s213, %s215
      %p222 = scmp.eq.s32.totalorder %s23, 1
      %p223 = por %p221, %p222
      %p224 = scmp.ne.s32.totalorder %s215, %s216
      %p225 = scmp.eq.s32.totalorder %s23, 0
      %p226 = por %p224, %p225
      %p227 = scmp.ne.s32.totalorder %s215, %s216
      %p228 = scmp.eq.s32.totalorder %s24, 1
      %p229 = por %p227, %p228
      %p231 = scmp.ne.s32.totalorder %s216, %s230
      %p232 = scmp.eq.s32.totalorder %s24, 0
      %p233 = por %p231, %p232
      %s234 = ssub.s32 %s25, %s37
      %s235 = ssub.s32 %s26, %s33
      %s236 = sor.u32 %s234, %s235
      %p237 = scmp.eq.s32.totalorder %s236, 0
      %s239 = sadd.s32 %s238, 1
      %s240 = scalar_select %p237, %s238, %s239
      %p243 = pneg %p237
      %p244 = scmp.eq.s32.totalorder %s18, 1
      %p245 = por %p243, %p244
      %p246 = scmp.ne.s32.totalorder %s238, %s241
      %p247 = scmp.eq.s32.totalorder %s18, 0
      %p248 = por %p246, %p247
      %p249 = scmp.ne.s32.totalorder %s238, %s241
      %p250 = scmp.eq.s32.totalorder %s23, 1
      %p251 = por %p249, %p250
      %p252 = scmp.ne.s32.totalorder %s241, %s242
      %p253 = scmp.eq.s32.totalorder %s23, 0
      %p254 = por %p252, %p253
      %p255 = scmp.ne.s32.totalorder %s241, %s242
      %p256 = scmp.eq.s32.totalorder %s24, 1
      %p257 = por %p255, %p256
      %p259 = scmp.ne.s32.totalorder %s242, %s258
      %p260 = scmp.eq.s32.totalorder %s24, 0
      %p261 = por %p259, %p260
      %p262 = scmp.le.s32.totalorder 1, %s18
      %p263 = scmp.lt.s32.totalorder %s18, 3
      %p264 = pnand %p262, %p263
      %p265 = pneg %p264
      // Predicated region
      $region9: #{tpu_custom_call.1} parent=5 // pred_check
        _
      $region10: #{tpu_custom_call.1} parent=5 // pred_check_branch
        %267 = sbr.rel (%p264) target = $region12
      $region11: #{tpu_custom_call.1} parent=5 // pred_region
        %s268 = ssub.s32 %s18, 1
        // Predicated region
        $region13: #{tpu_custom_call.1} parent=11 // pred_check
          %p269 = pneg %p79
        $region14: #{tpu_custom_call.1} parent=11 // pred_check_branch
          %271 = sbr.rel (%p269) target = $region16
        $region15: #{tpu_custom_call.1} parent=11 // pred_region
          _
        $region16: #{tpu_custom_call.1} parent=11 // pred_fallthru
          _
        // Predicated region
        $region17: #{tpu_custom_call.1} parent=11 // pred_check
          %p272 = pneg %p100
        $region18: #{tpu_custom_call.1} parent=11 // pred_check_branch
          %274 = sbr.rel (%p272) target = $region20
        $region19: #{tpu_custom_call.1} parent=11 // pred_region
          _
        $region20: #{tpu_custom_call.1} parent=11 // pred_fallthru
          _
        // Predicated region
        $region21: #{tpu_custom_call.1} parent=11 // pred_check
          %p275 = pneg %p121
        $region22: #{tpu_custom_call.1} parent=11 // pred_check_branch
          %277 = sbr.rel (%p275) target = $region24
        $region23: #{tpu_custom_call.1} parent=11 // pred_region
          _
        $region24: #{tpu_custom_call.1} parent=11 // pred_fallthru
          _
        // Predicated region
        $region25: #{tpu_custom_call.1} parent=11 // pred_check
          %p278 = pneg %p142
        $region26: #{tpu_custom_call.1} parent=11 // pred_check_branch
          %280 = sbr.rel (%p278) target = $region28
        $region27: #{tpu_custom_call.1} parent=11 // pred_region
          _
        $region28: #{tpu_custom_call.1} parent=11 // pred_fallthru
          _
        // Predicated region
        $region29: #{tpu_custom_call.1} parent=11 // pred_check
          %p281 = pneg %p163
        $region30: #{tpu_custom_call.1} parent=11 // pred_check_branch
          %283 = sbr.rel (%p281) target = $region32
        $region31: #{tpu_custom_call.1} parent=11 // pred_region
          _
        $region32: #{tpu_custom_call.1} parent=11 // pred_fallthru
          _
        // Predicated region
        $region33: #{tpu_custom_call.1} parent=11 // pred_check
          %p284 = pneg %p184
        $region34: #{tpu_custom_call.1} parent=11 // pred_check_branch
          %286 = sbr.rel (%p284) target = $region36
        $region35: #{tpu_custom_call.1} parent=11 // pred_region
          _
        $region36: #{tpu_custom_call.1} parent=11 // pred_fallthru
          _
        // Predicated region
        $region37: #{tpu_custom_call.1} parent=11 // pred_check
          %p287 = pneg %p205
        $region38: #{tpu_custom_call.1} parent=11 // pred_check_branch
          %289 = sbr.rel (%p287) target = $region40
        $region39: #{tpu_custom_call.1} parent=11 // pred_region
          _
        $region40: #{tpu_custom_call.1} parent=11 // pred_fallthru
          _
        // Predicated region
        $region41: #{tpu_custom_call.1} parent=11 // pred_check
          %p290 = pneg %p226
        $region42: #{tpu_custom_call.1} parent=11 // pred_check_branch
          %292 = sbr.rel (%p290) target = $region44
        $region43: #{tpu_custom_call.1} parent=11 // pred_region
          _
        $region44: #{tpu_custom_call.1} parent=11 // pred_fallthru
          _
      $region12: #{tpu_custom_call.1} parent=5 // pred_fallthru
        _
      %p293 = scmp.lt.s32.totalorder %s18, 2
      // Predicated region
      $region45: #{tpu_custom_call.1} parent=5 // pred_check
        %p294 = pneg %p293
      $region46: #{tpu_custom_call.1} parent=5 // pred_check_branch
        %296 = sbr.rel (%p294) target = $region48
      $region47: #{tpu_custom_call.1} parent=5 // pred_region
        // Predicated region
        $region49: #{tpu_custom_call.1} parent=47 // pred_check
          %p297 = pneg %p52
        $region50: #{tpu_custom_call.1} parent=47 // pred_check_branch
          %299 = sbr.rel (%p297) target = $region52
        $region51: #{tpu_custom_call.1} parent=47 // pred_region
          %s300 = smul.u32 2, %s26
          %p301 = scmp.lt.s32.totalorder %s25, 1
          %s302 = scalar_select %p301, %s25, 1
          %p303 = scmp.lt.s32.totalorder %s300, 1
          %s304 = scalar_select %p303, %s300, 1
          %s305 = smul.addr %s302, 10
          %s306 = sadd.s32 %s304, %s305
          %s307 = smul.addr %s306, 8
          %s308 = scalar_lea.vmem %s0, %s307
          %s309 = smul.u32 2, %s26
        $region52: #{tpu_custom_call.1} parent=47 // pred_fallthru
          _
      $region48: #{tpu_custom_call.1} parent=5 // pred_fallthru
        _
      %p310 = scmp.le.s32.totalorder 1, %s18
      %p311 = scmp.lt.s32.totalorder %s18, 3
      %p312 = pnand %p310, %p311
      %p313 = pneg %p312
      // Predicated region
      $region53: #{tpu_custom_call.1} parent=5 // pred_check
        _
      $region54: #{tpu_custom_call.1} parent=5 // pred_check_branch
        %315 = sbr.rel (%p312) target = $region56
      $region55: #{tpu_custom_call.1} parent=5 // pred_region
        %s316 = ssub.s32 %s18, 1
        %s317 = smul.u32 2, %s28
        %p318 = scmp.lt.s32.totalorder %s27, 1
        %s319 = scalar_select %p318, %s27, 1
        %p320 = scmp.lt.s32.totalorder %s317, 1
        %s321 = scalar_select %p320, %s317, 1
        %s322 = smul.addr %s319, 10
        %s323 = sadd.s32 %s321, %s322
        %s324 = smul.addr %s323, 8
        %s325 = scalar_lea.vmem %s0, %s324
        %p326 = pneg %p58
        %p327 = pneg %p55
        %p328 = pneg %p79
        %p329 = pneg %p76
        %p330 = pneg %p100
        %p331 = pneg %p97
        %p332 = pneg %p121
        %p333 = pneg %p118
        %p334 = pneg %p142
        %p335 = pneg %p139
        %p336 = pneg %p163
        %p337 = pneg %p160
        %p338 = pneg %p184
        %p339 = pneg %p181
        %p340 = pneg %p205
        %p341 = pneg %p202
        %p342 = pneg %p226
        %p343 = pneg %p223
        %p344 = pneg %p254
        %p345 = pneg %p251
        %s346 = sand.u32 %s241, 1
        %s347 = scalar_lea.sflag [#allocation3], %s346
        %s348 = sand.u32 %s241, 1
        %s349 = smul.addr %s348, 8
        %s350 = scalar_lea.vmem [#allocation2], %s349
        %s351 = smul.u32 2, %s28
        %p352 = scmp.lt.s32.totalorder %s27, 1
        %s353 = scalar_select %p352, %s27, 1
        %p354 = scmp.lt.s32.totalorder %s351, 1
        %s355 = scalar_select %p354, %s351, 1
        %s356 = smul.addr %s353, 10
        %s357 = sadd.s32 %s355, %s356
        %s358 = smul.addr %s357, 8
        %s359 = scalar_lea.vmem %s0, %s358
        %s360 = smul.u32 2, %s28
        %s361 = smul.u32 2, %s28
        %v362 = vld [vmem:[%s359] sm:$0xff]
        %v363 = vld [vmem:[%s359 + $0x8] sm:$0xff]
        %v364 = vld [vmem:[%s359 + $0x10] sm:$0xff]
        %v365 = vld [vmem:[%s359 + $0x18] sm:$0xff]
        %v366 = vld [vmem:[%s359 + $0x20] sm:$0xff]
        %v367 = vld [vmem:[%s359 + $0x28] sm:$0xff]
        %v368 = vld [vmem:[%s359 + $0x30] sm:$0xff]
        %v369 = vld [vmem:[%s359 + $0x38] sm:$0xff]
        %v370 = vld [vmem:[%s359 + $0x40] sm:$0x1]
        %v371 = vld [vmem:[%s359 + $0x48] sm:$0x1]
        %v372 = vld [vmem:[%s1] sm:$0xff]
        %v373 = vld [vmem:[%s1 + $0x8] sm:$0xff]
        %v374 = vld [vmem:[%s1 + $0x10] sm:$0xff]
        %v375 = vld [vmem:[%s1 + $0x18] sm:$0xff]
        %v376 = vld [vmem:[%s1 + $0x20] sm:$0x1]
        %v377 = vld [vmem:[%s2] sm:$0xff]
        %v378 = vld [vmem:[%s2 + $0x8] sm:$0xff]
        %v379 = vld [vmem:[%s2 + $0x10] sm:$0xff]
        %v380 = vld [vmem:[%s2 + $0x18] sm:$0xff]
        %v381 = vld [vmem:[%s2 + $0x20] sm:$0x1]
        %383 = vset.pattern.permute.xlu0 0
        %384 = vperm.xlu0 %383, %v377
        %v385 = vpop.permute.xlu0 %384
        %388 = vset.pattern.permute.xlu0 0
        %389 = vperm.xlu0 %388, %v378
        %v390 = vpop.permute.xlu0 %389
        %393 = vset.pattern.permute.xlu0 0
        %394 = vperm.xlu0 %393, %v379
        %v395 = vpop.permute.xlu0 %394
        %398 = vset.pattern.permute.xlu0 0
        %399 = vperm.xlu0 %398, %v380
        %v400 = vpop.permute.xlu0 %399
        %403 = vset.pattern.permute.xlu0 0
        %404 = vperm.xlu0 %403, %v381
        %v405 = vpop.permute.xlu0 %404
        %vm407 = vcmask 269312
        %v409 = vsel %vm407, %v372, 0
        %v412 = vsel %vm407, %v373, 0
        %v415 = vsel %vm407, %v374, 0
        %v418 = vsel %vm407, %v375, 0
        %v421 = vsel %vm407, %v376, 0
        %vm423 = vcmask 1040384
        %v425 = vsel %vm423, %v370, 0
        %v428 = vsel %vm423, %v371, 0
        %430 = vmatprep.subr.mxu0 0.0
        %431 = vmatpush1.msra.mxu0 0.0
        %432 = vmatprep.subr.mxu0 0.0
        %433 = vmatpush1.msra.mxu0 0.0
        %434 = vmatprep.subr.mxu0 0.0
        %435 = vmatpush1.msra.mxu0 0.0
        %436 = vmatprep.subr.mxu0 0.0
        %437 = vmatpush1.msra.mxu0 0.0
        %438 = vmatprep.subr.mxu0 0.0
        %439 = vmatpush1.msra.mxu0 0.0
        %440 = vmatprep.subr.mxu0 0.0
        %441 = vmatpush1.msra.mxu0 0.0
        %442 = vmatprep.subr.mxu0 0.0
        %443 = vmatpush1.msra.mxu0 0.0
        %444 = vmatprep.subr.mxu0 0.0
        %445 = vmatpush1.msra.mxu0 0.0
        %446 = vmatprep.subr.mxu0 0.0
        %447 = vmatpush1.msra.mxu0 0.0
        %448 = vmatprep.subr.mxu0 0.0
        %449 = vmatpush1.msra.mxu0 0.0
        %450 = vmatprep.subr.mxu0 0.0
        %451 = vmatpush1.msra.mxu0 0.0
        %452 = vmatprep.subr.mxu0 %v428
        %453 = vmatpush1.msra.mxu0 %v425
        %454 = vmatprep.subr.mxu0 %v369
        %455 = vmatpush1.msra.mxu0 %v368
        %456 = vmatprep.subr.mxu0 %v367
        %457 = vmatpush1.msra.mxu0 %v366
        %458 = vmatprep.subr.mxu0 %v365
        %459 = vmatpush1.msra.mxu0 %v364
        %460 = vmatprep.subr.mxu0 %v363
        %461 = vmatpush1.msra.mxu0 %v362
        %462 = vmatprep.subr.mxu0 0.0
        %463 = vmatpush2.msra.mxu0 0.0
        %464 = vmatprep.subr.mxu0 0.0
        %465 = vmatpush2.msra.mxu0 0.0
        %466 = vmatprep.subr.mxu0 0.0
        %467 = vmatpush2.msra.mxu0 0.0
        %468 = vmatprep.subr.mxu0 0.0
        %469 = vmatpush2.msra.mxu0 0.0
        %470 = vmatprep.subr.mxu0 0.0
        %471 = vmatpush2.msra.mxu0 0.0
        %472 = vmatprep.subr.mxu0 0.0
        %473 = vmatpush2.msra.mxu0 0.0
        %474 = vmatprep.subr.mxu0 0.0
        %475 = vmatpush2.msra.mxu0 0.0
        %476 = vmatprep.subr.mxu0 0.0
        %477 = vmatpush2.msra.mxu0 0.0
        %478 = vmatprep.subr.mxu0 0.0
        %479 = vmatpush2.msra.mxu0 0.0
        %480 = vmatprep.subr.mxu0 0.0
        %481 = vmatpush2.msra.mxu0 0.0
        %482 = vmatprep.subr.mxu0 0.0
        %483 = vmatpush2.msra.mxu0 0.0
        %484 = vmatprep.subr.mxu0 0.0
        %485 = vmatpush2.msra.mxu0 0.0
        %486 = vmatprep.subr.mxu0 0.0
        %487 = vmatpush2.msra.mxu0 0.0
        %488 = vmatprep.subr.mxu0 0.0
        %489 = vmatpush2.msra.mxu0 0.0
        %490 = vmatprep.subr.mxu0 0.0
        %491 = vmatpush2.msra.mxu0 0.0
        %492 = vmatprep.subr.mxu0 0.0
        %493 = vmatpush2.msra.mxu0 0.0
        %494 = vmatprep.mubr.f32.mxu0 0.0
        %495 = vmatmul.mubr.f32.gmra.mxu0 %v409
        %v496 = vpop.f32.mrf.mxu0
        %v497 = vadd.f32 %v385, %v496
        %v498 = vpop.f32.mrf.mxu0
        %v499 = vadd.f32 %v385, %v498
        %500 = vmatprep.mubr.f32.mxu0 0.0
        %501 = vmatmul.mubr.f32.gmra.mxu0 %v412
        %v502 = vpop.f32.mrf.mxu0
        %v503 = vadd.f32 %v390, %v502
        %v504 = vpop.f32.mrf.mxu0
        %v505 = vadd.f32 %v390, %v504
        %506 = vmatprep.mubr.f32.mxu0 0.0
        %507 = vmatmul.mubr.f32.gmra.mxu0 %v415
        %v508 = vpop.f32.mrf.mxu0
        %v509 = vadd.f32 %v395, %v508
        %v510 = vpop.f32.mrf.mxu0
        %v511 = vadd.f32 %v395, %v510
        %512 = vmatprep.mubr.f32.mxu0 0.0
        %513 = vmatmul.mubr.f32.gmra.mxu0 %v418
        %v514 = vpop.f32.mrf.mxu0
        %v515 = vadd.f32 %v400, %v514
        %v516 = vpop.f32.mrf.mxu0
        %v517 = vadd.f32 %v400, %v516
        %518 = vmatprep.mubr.f32.mxu0 0.0
        %519 = vmatmul.mubr.f32.gmra.mxu0 %v421
        %v520 = vpop.f32.mrf.mxu0
        %v521 = vadd.f32 %v405, %v520
        %v522 = vpop.f32.mrf.mxu0
        %v523 = vadd.f32 %v405, %v522
        %524 = vdwg.mxu0
        %v525 = vmax.f32 %v497, 0.0
        %v526 = vmax.f32 %v499, 0.0
        %v527 = vmax.f32 %v503, 0.0
        %v528 = vmax.f32 %v505, 0.0
        %v529 = vmax.f32 %v509, 0.0
        %v530 = vmax.f32 %v511, 0.0
        %v531 = vmax.f32 %v515, 0.0
        %v532 = vmax.f32 %v517, 0.0
        %v533 = vmax.f32 %v521, 0.0
        %v534 = vmax.f32 %v523, 0.0
        %v535 = vld [vmem:[%s3] sm:$0xff]
        %v536 = vld [vmem:[%s4] sm:$0xff]
        %538 = vset.pattern.permute.xlu0 0
        %539 = vperm.xlu0 %538, %v536
        %v540 = vpop.permute.xlu0 %539
        %v543 = vsel %vm407, %v535, 0
        %v546 = vsel %vm423, %v533, 0
        %v549 = vsel %vm423, %v534, 0
        %551 = vmatprep.subr.mxu0 0.0
        %552 = vmatpush1.msra.mxu0 0.0
        %553 = vmatprep.subr.mxu0 0.0
        %554 = vmatpush1.msra.mxu0 0.0
        %555 = vmatprep.subr.mxu0 0.0
        %556 = vmatpush1.msra.mxu0 0.0
        %557 = vmatprep.subr.mxu0 0.0
        %558 = vmatpush1.msra.mxu0 0.0
        %559 = vmatprep.subr.mxu0 0.0
        %560 = vmatpush1.msra.mxu0 0.0
        %561 = vmatprep.subr.mxu0 0.0
        %562 = vmatpush1.msra.mxu0 0.0
        %563 = vmatprep.subr.mxu0 0.0
        %564 = vmatpush1.msra.mxu0 0.0
        %565 = vmatprep.subr.mxu0 0.0
        %566 = vmatpush1.msra.mxu0 0.0
        %567 = vmatprep.subr.mxu0 0.0
        %568 = vmatpush1.msra.mxu0 0.0
        %569 = vmatprep.subr.mxu0 0.0
        %570 = vmatpush1.msra.mxu0 0.0
        %571 = vmatprep.subr.mxu0 0.0
        %572 = vmatpush1.msra.mxu0 0.0
        %573 = vmatprep.subr.mxu0 %v549
        %574 = vmatpush1.msra.mxu0 %v546
        %575 = vmatprep.subr.mxu0 %v532
        %576 = vmatpush1.msra.mxu0 %v531
        %577 = vmatprep.subr.mxu0 %v530
        %578 = vmatpush1.msra.mxu0 %v529
        %579 = vmatprep.subr.mxu0 %v528
        %580 = vmatpush1.msra.mxu0 %v527
        %581 = vmatprep.subr.mxu0 %v526
        %582 = vmatpush1.msra.mxu0 %v525
        %583 = vmatprep.subr.mxu0 0.0
        %584 = vmatpush2.msra.mxu0 0.0
        %585 = vmatprep.subr.mxu0 0.0
        %586 = vmatpush2.msra.mxu0 0.0
        %587 = vmatprep.subr.mxu0 0.0
        %588 = vmatpush2.msra.mxu0 0.0
        %589 = vmatprep.subr.mxu0 0.0
        %590 = vmatpush2.msra.mxu0 0.0
        %591 = vmatprep.subr.mxu0 0.0
        %592 = vmatpush2.msra.mxu0 0.0
        %593 = vmatprep.subr.mxu0 0.0
        %594 = vmatpush2.msra.mxu0 0.0
        %595 = vmatprep.subr.mxu0 0.0
        %596 = vmatpush2.msra.mxu0 0.0
        %597 = vmatprep.subr.mxu0 0.0
        %598 = vmatpush2.msra.mxu0 0.0
        %599 = vmatprep.subr.mxu0 0.0
        %600 = vmatpush2.msra.mxu0 0.0
        %601 = vmatprep.subr.mxu0 0.0
        %602 = vmatpush2.msra.mxu0 0.0
        %603 = vmatprep.subr.mxu0 0.0
        %604 = vmatpush2.msra.mxu0 0.0
        %605 = vmatprep.subr.mxu0 0.0
        %606 = vmatpush2.msra.mxu0 0.0
        %607 = vmatprep.subr.mxu0 0.0
        %608 = vmatpush2.msra.mxu0 0.0
        %609 = vmatprep.subr.mxu0 0.0
        %610 = vmatpush2.msra.mxu0 0.0
        %611 = vmatprep.subr.mxu0 0.0
        %612 = vmatpush2.msra.mxu0 0.0
        %613 = vmatprep.subr.mxu0 0.0
        %614 = vmatpush2.msra.mxu0 0.0
        %615 = vmatprep.mubr.f32.mxu0 0.0
        %616 = vmatmul.mubr.f32.gmra.mxu0 %v543
        %v617 = vpop.f32.mrf.mxu0
        %v618 = vadd.f32 %v540, %v617
        %v619 = vpop.f32.mrf.mxu0
        %v620 = vadd.f32 %v540, %v619
        %621 = vdwg.mxu0
        %v622 = vmax.f32 %v618, 0.0
        %v623 = vmax.f32 %v620, 0.0
        %v624 = vld [vmem:[%s5] sm:$0xff]
        %v625 = vld [vmem:[%s5 + $0x8] sm:$0xff]
        %v626 = vld [vmem:[%s6] sm:$0xff]
        %v627 = vld [vmem:[%s6 + $0x8] sm:$0xff]
        %629 = vset.pattern.permute.xlu0 0
        %630 = vperm.xlu0 %629, %v626
        %v631 = vpop.permute.xlu0 %630
        %634 = vset.pattern.permute.xlu0 0
        %635 = vperm.xlu0 %634, %v627
        %v636 = vpop.permute.xlu0 %635
        %vm638 = vcmask 64512
        %v640 = vsel %vm638, %v624, 0
        %v643 = vsel %vm638, %v625, 0
        %645 = vmatprep.subr.mxu0 0.0
        %646 = vmatpush1.msra.mxu0 0.0
        %647 = vmatprep.subr.mxu0 0.0
        %648 = vmatpush1.msra.mxu0 0.0
        %649 = vmatprep.subr.mxu0 0.0
        %650 = vmatpush1.msra.mxu0 0.0
        %651 = vmatprep.subr.mxu0 0.0
        %652 = vmatpush1.msra.mxu0 0.0
        %653 = vmatprep.subr.mxu0 0.0
        %654 = vmatpush1.msra.mxu0 0.0
        %655 = vmatprep.subr.mxu0 0.0
        %656 = vmatpush1.msra.mxu0 0.0
        %657 = vmatprep.subr.mxu0 0.0
        %658 = vmatpush1.msra.mxu0 0.0
        %659 = vmatprep.subr.mxu0 0.0
        %660 = vmatpush1.msra.mxu0 0.0
        %661 = vmatprep.subr.mxu0 0.0
        %662 = vmatpush1.msra.mxu0 0.0
        %663 = vmatprep.subr.mxu0 0.0
        %664 = vmatpush1.msra.mxu0 0.0
        %665 = vmatprep.subr.mxu0 0.0
        %666 = vmatpush1.msra.mxu0 0.0
        %667 = vmatprep.subr.mxu0 0.0
        %668 = vmatpush1.msra.mxu0 0.0
        %669 = vmatprep.subr.mxu0 0.0
        %670 = vmatpush1.msra.mxu0 0.0
        %671 = vmatprep.subr.mxu0 0.0
        %672 = vmatpush1.msra.mxu0 0.0
        %673 = vmatprep.subr.mxu0 0.0
        %674 = vmatpush1.msra.mxu0 0.0
        %675 = vmatprep.subr.mxu0 %v623
        %676 = vmatpush1.msra.mxu0 %v622
        %677 = vmatprep.subr.mxu0 0.0
        %678 = vmatpush2.msra.mxu0 0.0
        %679 = vmatprep.subr.mxu0 0.0
        %680 = vmatpush2.msra.mxu0 0.0
        %681 = vmatprep.subr.mxu0 0.0
        %682 = vmatpush2.msra.mxu0 0.0
        %683 = vmatprep.subr.mxu0 0.0
        %684 = vmatpush2.msra.mxu0 0.0
        %685 = vmatprep.subr.mxu0 0.0
        %686 = vmatpush2.msra.mxu0 0.0
        %687 = vmatprep.subr.mxu0 0.0
        %688 = vmatpush2.msra.mxu0 0.0
        %689 = vmatprep.subr.mxu0 0.0
        %690 = vmatpush2.msra.mxu0 0.0
        %691 = vmatprep.subr.mxu0 0.0
        %692 = vmatpush2.msra.mxu0 0.0
        %693 = vmatprep.subr.mxu0 0.0
        %694 = vmatpush2.msra.mxu0 0.0
        %695 = vmatprep.subr.mxu0 0.0
        %696 = vmatpush2.msra.mxu0 0.0
        %697 = vmatprep.subr.mxu0 0.0
        %698 = vmatpush2.msra.mxu0 0.0
        %699 = vmatprep.subr.mxu0 0.0
        %700 = vmatpush2.msra.mxu0 0.0
        %701 = vmatprep.subr.mxu0 0.0
        %702 = vmatpush2.msra.mxu0 0.0
        %703 = vmatprep.subr.mxu0 0.0
        %704 = vmatpush2.msra.mxu0 0.0
        %705 = vmatprep.subr.mxu0 0.0
        %706 = vmatpush2.msra.mxu0 0.0
        %707 = vmatprep.subr.mxu0 0.0
        %708 = vmatpush2.msra.mxu0 0.0
        %709 = vmatprep.mubr.f32.mxu0 0.0
        %710 = vmatmul.mubr.f32.gmra.mxu0 %v640
        %v711 = vpop.f32.mrf.mxu0
        %v712 = vadd.f32 %v631, %v711
        %v713 = vpop.f32.mrf.mxu0
        %v714 = vadd.f32 %v631, %v713
        %715 = vmatprep.mubr.f32.mxu0 0.0
        %716 = vmatmul.mubr.f32.gmra.mxu0 %v643
        %v717 = vpop.f32.mrf.mxu0
        %v718 = vadd.f32 %v636, %v717
        %v719 = vpop.f32.mrf.mxu0
        %v720 = vadd.f32 %v636, %v719
        %721 = vdwg.mxu0
        %v722 = vmax.f32 %v712, 0.0
        %v723 = vmax.f32 %v714, 0.0
        %v724 = vmax.f32 %v718, 0.0
        %v725 = vmax.f32 %v720, 0.0
        %v726 = vld [vmem:[%s7] sm:$0xf]
        %v727 = vld [vmem:[%s8] sm:$0xf]
        %729 = vset.pattern.permute.xlu0 0
        %730 = vperm.xlu0 %729, %v727
        %v731 = vpop.permute.xlu0 %730
        %vm733 = vcmask 130048
        %v735 = vsel %vm733, %v726, 0
        %737 = vmatprep.subr.mxu0 0.0
        %738 = vmatpush1.msra.mxu0 0.0
        %739 = vmatprep.subr.mxu0 0.0
        %740 = vmatpush1.msra.mxu0 0.0
        %741 = vmatprep.subr.mxu0 0.0
        %742 = vmatpush1.msra.mxu0 0.0
        %743 = vmatprep.subr.mxu0 0.0
        %744 = vmatpush1.msra.mxu0 0.0
        %745 = vmatprep.subr.mxu0 0.0
        %746 = vmatpush1.msra.mxu0 0.0
        %747 = vmatprep.subr.mxu0 0.0
        %748 = vmatpush1.msra.mxu0 0.0
        %749 = vmatprep.subr.mxu0 0.0
        %750 = vmatpush1.msra.mxu0 0.0
        %751 = vmatprep.subr.mxu0 0.0
        %752 = vmatpush1.msra.mxu0 0.0
        %753 = vmatprep.subr.mxu0 0.0
        %754 = vmatpush1.msra.mxu0 0.0
        %755 = vmatprep.subr.mxu0 0.0
        %756 = vmatpush1.msra.mxu0 0.0
        %757 = vmatprep.subr.mxu0 0.0
        %758 = vmatpush1.msra.mxu0 0.0
        %759 = vmatprep.subr.mxu0 0.0
        %760 = vmatpush1.msra.mxu0 0.0
        %761 = vmatprep.subr.mxu0 0.0
        %762 = vmatpush1.msra.mxu0 0.0
        %763 = vmatprep.subr.mxu0 0.0
        %764 = vmatpush1.msra.mxu0 0.0
        %765 = vmatprep.subr.mxu0 %v725
        %766 = vmatpush1.msra.mxu0 %v724
        %767 = vmatprep.subr.mxu0 %v723
        %768 = vmatpush1.msra.mxu0 %v722
        %769 = vmatprep.subr.mxu0 0.0
        %770 = vmatpush2.msra.mxu0 0.0
        %771 = vmatprep.subr.mxu0 0.0
        %772 = vmatpush2.msra.mxu0 0.0
        %773 = vmatprep.subr.mxu0 0.0
        %774 = vmatpush2.msra.mxu0 0.0
        %775 = vmatprep.subr.mxu0 0.0
        %776 = vmatpush2.msra.mxu0 0.0
        %777 = vmatprep.subr.mxu0 0.0
        %778 = vmatpush2.msra.mxu0 0.0
        %779 = vmatprep.subr.mxu0 0.0
        %780 = vmatpush2.msra.mxu0 0.0
        %781 = vmatprep.subr.mxu0 0.0
        %782 = vmatpush2.msra.mxu0 0.0
        %783 = vmatprep.subr.mxu0 0.0
        %784 = vmatpush2.msra.mxu0 0.0
        %785 = vmatprep.subr.mxu0 0.0
        %786 = vmatpush2.msra.mxu0 0.0
        %787 = vmatprep.subr.mxu0 0.0
        %788 = vmatpush2.msra.mxu0 0.0
        %789 = vmatprep.subr.mxu0 0.0
        %790 = vmatpush2.msra.mxu0 0.0
        %791 = vmatprep.subr.mxu0 0.0
        %792 = vmatpush2.msra.mxu0 0.0
        %793 = vmatprep.subr.mxu0 0.0
        %794 = vmatpush2.msra.mxu0 0.0
        %795 = vmatprep.subr.mxu0 0.0
        %796 = vmatpush2.msra.mxu0 0.0
        %797 = vmatprep.subr.mxu0 0.0
        %798 = vmatpush2.msra.mxu0 0.0
        %799 = vmatprep.subr.mxu0 0.0
        %800 = vmatpush2.msra.mxu0 0.0
        %801 = vmatprep.mubr.f32.mxu0 0.0
        %802 = vmatmul.mubr.f32.gmra.mxu0 %v735
        %v803 = vpop.f32.mrf.mxu0
        %v804 = vadd.f32 %v731, %v803
        %v805 = vpop.f32.mrf.mxu0
        %v806 = vadd.f32 %v731, %v805
        %807 = vdwg.mxu0
        %v808 = vmax.f32 %v804, 0.0
        %v809 = vmax.f32 %v806, 0.0
        %v812 = vcombine.low %v808, %v809
        %814 = vst [vmem:[%s350] sm:$0xff] %v812
        %s815 = sand.u32 %s241, 1
        %s816 = scalar_lea.sflag [#allocation3], %s815
        %s817 = sand.u32 %s241, 1
        %s818 = smul.addr %s817, 8
        %s819 = scalar_lea.vmem [#allocation2], %s818
        // Predicated region
        $region57: #{tpu_custom_call.1} parent=55 // pred_check
          %p820 = pneg %p251
        $region58: #{tpu_custom_call.1} parent=55 // pred_check_branch
          %822 = sbr.rel (%p820) target = $region60
        $region59: #{tpu_custom_call.1} parent=55 // pred_region
          %s823 = smul.u32 2, %s28
          %s825 = ssub.s32 128, 128
          %826 = vsyncadd %s816, %s825
          %s827 = smul.addr %s27, 2
          %s828 = sadd.s32 %s823, %s827
          %s829 = smul.addr %s828, 64
          %s830 = scalar_lea.hbm %s9, %s829
          %s832 = sshll.u32 %s819, 4
          %s833 = int_to_ptr.vmem [resolvable:$true] %s832
          %835 = dma.vmem_to_hbm [thread:$0]  %s833, 128, %s830, %s816
        $region60: #{tpu_custom_call.1} parent=55 // pred_fallthru
          _
      $region56: #{tpu_custom_call.1} parent=5 // pred_fallthru
        _
      %p836 = scmp.le.s32.totalorder 2, %s18
      // Predicated region
      $region61: #{tpu_custom_call.1} parent=5 // pred_check
        %p837 = pneg %p836
      $region62: #{tpu_custom_call.1} parent=5 // pred_check_branch
        %839 = sbr.rel (%p837) target = $region64
      $region63: #{tpu_custom_call.1} parent=5 // pred_region
        %s840 = ssub.s32 %s18, 2
        // Predicated region
        $region65: #{tpu_custom_call.1} parent=63 // pred_check
          %p841 = pneg %p257
        $region66: #{tpu_custom_call.1} parent=63 // pred_check_branch
          %843 = sbr.rel (%p841) target = $region68
        $region67: #{tpu_custom_call.1} parent=63 // pred_region
          %s844 = sand.u32 %s242, 1
          %s845 = scalar_lea.sflag [#allocation3], %s844
          %s846 = sand.u32 %s242, 1
          %s847 = smul.addr %s846, 8
          %s848 = scalar_lea.vmem [#allocation2], %s847
          %849 = dma.done %s845, 128
        $region68: #{tpu_custom_call.1} parent=63 // pred_fallthru
          _
      $region64: #{tpu_custom_call.1} parent=5 // pred_fallthru
        _
    $region6: #{tpu_custom_call.1} parent=1 // loop_footer
      %s22 = sadd.s32 1, %s18
    $region7: #{tpu_custom_call.1} parent=1 // loop_footer_branch
      %17 = sbr.rel target = $region3
    $region8: #{tpu_custom_call.1} parent=1 // loop_exit
      _
    %850 = vsyncpa [#allocation3], 1
    %s851 = scalar_lea.sflag [#allocation3], 1
    %852 = vsyncpa %s851, 1

</llo_original>
